<compile_context>
chip_gen: v7x
topology: tpu7x:2x2x1
jax: 0.10.0
libtpu: 0.0.40
codegen_flags: <defaults>
</compile_context>

<pallas_src>
import functools

import jax
import jax.numpy as jnp
from jax.experimental import pallas as pl
from jax.experimental.pallas import tpu as pltpu


LANE = 128


def _cdiv(a, b):
    return -(-a // b)


def _round_up(x, m):
    return _cdiv(x, m) * m


def _vmem_limit(bytes_needed):
    # 2x headroom for compiler-internal scratch, capped below v7x's 64 MiB physical VMEM.
    return int(min(48 * 1024 * 1024, max(8 * 1024 * 1024, 2 * bytes_needed)))


# --------------------------------------------------------------------------------------
# Kernel 1: streaming per-layer noise adds on a lane-dense flattened (R, 128) view.
# Grid: (row_tile i, layer l).  Per step:
#   x0_ref:    (TR, 128)     embedded activations, flattened (resident across l)
#   noise_ref: (1, TR, 128)  layer-l noise tile (streamed)
#   hid_ref:   (1, TR, 128)  hidden state for layer l (streamed out)
#   xfin_ref:  (TR, 128)     final activations (written only at l == L-1)
#   x_acc:     (TR, 128)     f32 running activation (VMEM scratch)
# --------------------------------------------------------------------------------------
def _stream_layers_kernel(x0_ref, noise_ref, hid_ref, xfin_ref, x_acc, *, num_layers):
    l = pl.program_id(1)

    @pl.when(l == 0)
    def _():
        x_acc[...] = x0_ref[...]

    x = x_acc[...] + noise_ref[0] * 0.01
    hid_ref[0] = x

    @pl.when(l < num_layers - 1)
    def _():
        x_acc[...] = x  # carry; skipped on the last layer (x stays live in vregs)

    @pl.when(l == num_layers - 1)
    def _():
        xfin_ref[...] = x


# --------------------------------------------------------------------------------------
# Kernel 2: LayerNorm over H + head projection, tiled over (rows, vocab).
# Grid: (m, v), v innermost "arbitrary".  Per step:
#   x_ref:      (TM, H)   final activations tile (resident across v)
#   gamma_ref:  (1, H)    LayerNorm weight
#   beta_ref:   (1, H)    LayerNorm bias
#   w_ref:      (TV, H)   head weight tile (nn.Linear layout, contracted on H)
#   logits_ref: (TM, TV)
#   y_sc:       (TM, H)   normalized activations (VMEM scratch, computed at v == 0)
# --------------------------------------------------------------------------------------
def _ln_head_kernel(x_ref, gamma_ref, beta_ref, w_ref, logits_ref, y_sc, *, ln_eps):
    v = pl.program_id(1)

    @pl.when(v == 0)
    def _():
        xm = x_ref[...]
        mean = jnp.mean(xm, axis=-1, keepdims=True)
        ctr = xm - mean
        var = jnp.mean(ctr * ctr, axis=-1, keepdims=True)
        y_sc[...] = ctr * jax.lax.rsqrt(var + ln_eps) * gamma_ref[...] + beta_ref[...]

    # y @ W^T on the MXU (contract H of both operands; no wrapper-side transpose copy).
    logits_ref[...] = jax.lax.dot_general(
        y_sc[...], w_ref[...],
        dimension_numbers=(((1,), (1,)), ((), ())),
        preferred_element_type=jnp.float32,
    ).astype(logits_ref.dtype)


def rwkv_model_forward(input_ids, emb_table, noise, ln_gamma, ln_beta, head_w,
                       ln_eps=1e-5):
    """input_ids: (B, S) int32; emb_table/head_w: (V, H); noise: (L, B, S, H).
    Returns (logits (B, S, V) f32, hidden_states: list of L arrays (B, S, H) f32)."""
    B, S = input_ids.shape
    V, H = emb_table.shape
    L = noise.shape[0]
    N = B * S

    # ---- Embedding gather (JAX glue). ----
    # TODO(synk): fuse the gather into kernel 1 (scalar-prefetched ids + per-row DMA
    # gather) to remove this extra N*H HBM round trip.
    x0 = jnp.take(emb_table, input_ids.reshape(-1), axis=0).astype(jnp.float32)  # (N, H)

    # ---- Phase 1: lane-dense flattened layout (no H padding). ----
    flat_len = N * H
    rem = (-flat_len) % LANE
    if rem:
        # Rare fallback (N*H not a multiple of 128): one small tail pad (full copy).
        x0_flat = jnp.pad(x0.reshape(-1), (0, rem))
        noise_flat = jnp.pad(noise.reshape(L, -1), ((0, 0), (0, rem)))
    else:
        # Common path (incl. toy config and any H % 128 == 0): pure reshapes, zero copies.
        x0_flat = x0.reshape(-1)
        noise_flat = noise.reshape(L, -1)
    flat_pad = flat_len + rem
    R = flat_pad // LANE
    x0_flat = x0_flat.reshape(R, LANE)
    noise_flat = noise_flat.reshape(L, R, LANE)

    if R <= 8:
        TR = R                                              # single full-extent tile
    else:
        # Big tiles (better HBM roofline) but >= 2 row tiles so v7x megacore splits work.
        TR = min(1024, _round_up(_cdiv(R, 2), 8))
    num_r = _cdiv(R, TR)
    # Partial last tiles rely on Pallas boundary handling (OOB writes dropped) — safe
    # for this purely elementwise kernel; avoids padding the large noise tensor.

    vmem1 = 9 * TR * LANE * 4  # 2x(noise,hid,x0,xfin double-buffered) + acc scratch
    hid_flat, xfin_flat = pl.pallas_call(
        functools.partial(_stream_layers_kernel, num_layers=L),
        out_shape=(
            jax.ShapeDtypeStruct((L, R, LANE), jnp.float32),
            jax.ShapeDtypeStruct((R, LANE), jnp.float32),
        ),
        grid_spec=pltpu.PrefetchScalarGridSpec(
            num_scalar_prefetch=0,
            grid=(num_r, L),
            in_specs=[
                pl.BlockSpec((TR, LANE), lambda i, l: (i, 0)),        # embedded x (flat)
                pl.BlockSpec((1, TR, LANE), lambda i, l: (l, i, 0)),  # noise (streamed)
            ],
            out_specs=[
                pl.BlockSpec((1, TR, LANE), lambda i, l: (l, i, 0)),  # hidden states
                pl.BlockSpec((TR, LANE), lambda i, l: (i, 0)),        # final x (l = L-1)
            ],
            scratch_shapes=[pltpu.VMEM((TR, LANE), jnp.float32)],
        ),
        compiler_params=pltpu.CompilerParams(
            dimension_semantics=("parallel", "arbitrary"),
            vmem_limit_bytes=_vmem_limit(vmem1)),
        cost_estimate=pl.CostEstimate(
            flops=2 * L * flat_pad,
            transcendentals=0,
            bytes_accessed=4 * flat_pad * (2 * L + 2)),
    )(x0_flat, noise_flat)

    if rem:
        hid = hid_flat.reshape(L, flat_pad)[:, :flat_len].reshape(L, B, S, H)
        x_final = xfin_flat.reshape(flat_pad)[:flat_len].reshape(N, H)
    else:
        hid = hid_flat.reshape(L, B, S, H)      # copy-free reshape, no padded slicing
        x_final = xfin_flat.reshape(N, H)

    # ---- Phase 2: LayerNorm + head projection, tiled over rows and vocab. ----
    TM = N if N <= 256 else 256
    TV = V if V <= 256 else 256                 # 256-wide tiles match v6e/v7x MXU
    num_m = _cdiv(N, TM)
    num_v = _cdiv(V, TV)

    gamma2 = ln_gamma.reshape(1, H).astype(jnp.float32)
    beta2 = ln_beta.reshape(1, H).astype(jnp.float32)
    w = head_w.astype(jnp.float32)              # (V, H); contracted on H in-kernel

    vmem2 = 4 * (2 * TM * H + 2 * TV * H + 2 * TM * TV + TM * H + 4 * H)
    logits_flat = pl.pallas_call(
        functools.partial(_ln_head_kernel, ln_eps=ln_eps),
        out_shape=jax.ShapeDtypeStruct((N, V), jnp.float32),
        grid_spec=pltpu.PrefetchScalarGridSpec(
            num_scalar_prefetch=0,
            grid=(num_m, num_v),
            in_specs=[
                pl.BlockSpec((TM, H), lambda m, v: (m, 0)),   # final x tile
                pl.BlockSpec((1, H), lambda m, v: (0, 0)),    # gamma
                pl.BlockSpec((1, H), lambda m, v: (0, 0)),    # beta
                pl.BlockSpec((TV, H), lambda m, v: (v, 0)),   # head weight tile
            ],
            out_specs=pl.BlockSpec((TM, TV), lambda m, v: (m, v)),
            scratch_shapes=[pltpu.VMEM((TM, H), jnp.float32)],
        ),
        compiler_params=pltpu.CompilerParams(
            dimension_semantics=("parallel", "arbitrary"),
            vmem_limit_bytes=_vmem_limit(vmem2)),
        cost_estimate=pl.CostEstimate(
            flops=2 * N * H * V + 8 * N * H,
            transcendentals=N,
            bytes_accessed=4 * (N * H + V * H + N * V + 2 * H)),
    )(x_final, gamma2, beta2, w)

    logits = logits_flat.reshape(B, S, V)
    # Per-layer list to match the PyTorch interface; each entry is a contiguous slice
    # of the unpadded stacked hidden tensor (no padded-region slicing passes).
    hidden_states = [hid[l] for l in range(L)]
    return logits, hidden_states


if __name__ == "__main__":
    # Small config consistent with the module: vocab=64, hidden=32, layers=2, batch=2, seq=8.
    B, S, H, V, L = 2, 8, 32, 64, 2

    key = jax.random.PRNGKey(0)
    k_ids, k_emb, k_head, k_noise = jax.random.split(key, 4)

    input_ids = jax.random.randint(k_ids, (B, S), 0, V, dtype=jnp.int32)

    # Deterministic parameter init (shapes from __init__):
    emb_table = jax.random.normal(k_emb, (V, H), dtype=jnp.float32) * 0.02   # nn.Embedding(V, H)
    head_w = jax.random.normal(k_head, (V, H), dtype=jnp.float32) * 0.02     # nn.Linear(H, V).weight
    ln_gamma = jnp.ones((H,), jnp.float32)                                   # nn.LayerNorm(H)
    ln_beta = jnp.zeros((H,), jnp.float32)

    # torch.randn_like noise per layer, drawn deterministically here.
    noise = jax.random.normal(k_noise, (L, B, S, H), dtype=jnp.float32)

    fwd = jax.jit(rwkv_model_forward)
    logits, hidden_states = fwd(input_ids, emb_table, noise, ln_gamma, ln_beta, head_w)
    jax.block_until_ready(logits)
    jax.block_until_ready(hidden_states)

    # Pure-JAX f32 reference.
    x_ref = jnp.take(emb_table, input_ids.reshape(-1), axis=0).reshape(B, S, H)
    hid_ref_list = []
    for l in range(L):
        x_ref = x_ref + noise[l] * 0.01
        hid_ref_list.append(x_ref)
    mean = jnp.mean(x_ref, axis=-1, keepdims=True)
    var = jnp.mean(jnp.square(x_ref - mean), axis=-1, keepdims=True)
    y_ref = (x_ref - mean) * jax.lax.rsqrt(var + 1e-5) * ln_gamma + ln_beta
    logits_ref = y_ref @ head_w.T

    assert jnp.allclose(logits, logits_ref, atol=5e-3, rtol=5e-3), "logits mismatch"
    for l in range(L):
        assert jnp.allclose(hidden_states[l], hid_ref_list[l], atol=1e-5), "hidden mismatch"

    print("KERNEL_OK")
</pallas_src>

<mosaic_0001>
module attributes {stable_mosaic.version = 11 : i64} {
  func.func @_stream_layers_kernel(%arg0: i32, %arg1: i32, %arg2: memref<4x128xf32, #tpu.memory_space<vmem>>, %arg3: memref<1x4x128xf32, #tpu.memory_space<vmem>>, %arg4: memref<1x4x128xf32, #tpu.memory_space<vmem>>, %arg5: memref<4x128xf32, #tpu.memory_space<vmem>>, %arg6: memref<4x128xf32, #tpu.memory_space<vmem>>) attributes {dimension_semantics = [#tpu.dimension_semantics<parallel>, #tpu.dimension_semantics<arbitrary>], iteration_bounds = array<i64: 1, 2>, scalar_prefetch = 0 : i64, scratch_operands = 1 : i64, tpu.core_type = #tpu.core_type<tc>, window_params = [{transform_indices = @transform_0, window_bounds = array<i64: 4, 128>}, {transform_indices = @transform_1, window_bounds = array<i64: 1, 4, 128>}, {transform_indices = @transform_2, window_bounds = array<i64: 1, 4, 128>}, {transform_indices = @transform_3, window_bounds = array<i64: 4, 128>}]} {
    %c0_i32 = arith.constant 0 : i32
    %0 = arith.cmpi eq, %arg1, %c0_i32 : i32
    %1 = arith.extui %0 : i1 to i32
    %c0_i32_0 = arith.constant 0 : i32
    %2 = arith.cmpi ne, %1, %c0_i32_0 : i32
    scf.if %2 {
      %c0_11 = arith.constant 0 : index
      %c0_12 = arith.constant 0 : index
      %18 = vector.load %arg2[%c0_11, %c0_12] : memref<4x128xf32, #tpu.memory_space<vmem>>, vector<4x128xf32>
      %c0_13 = arith.constant 0 : index
      %c0_14 = arith.constant 0 : index
      %19 = vector.load %arg6[%c0_13, %c0_14] : memref<4x128xf32, #tpu.memory_space<vmem>>, vector<4x128xf32>
      tpu.vector_store %arg6[%c0_13, %c0_14], %18 {strides = array<i32>} : memref<4x128xf32, #tpu.memory_space<vmem>>, vector<4x128xf32>,
    } else {
    }
    %c0 = arith.constant 0 : index
    %c0_1 = arith.constant 0 : index
    %3 = vector.load %arg6[%c0, %c0_1] : memref<4x128xf32, #tpu.memory_space<vmem>>, vector<4x128xf32>
    %c0_2 = arith.constant 0 : index
    %c0_3 = arith.constant 0 : index
    %c0_4 = arith.constant 0 : index
    %4 = vector.load %arg3[%c0_2, %c0_3, %c0_4] : memref<1x4x128xf32, #tpu.memory_space<vmem>>, vector<1x4x128xf32>
    %5 = vector.shape_cast %4 : vector<1x4x128xf32> to vector<4x128xf32>
    %cst = arith.constant 0.00999999977 : f32
    %6 = vector.broadcast %cst : f32 to vector<4x128xf32>
    %7 = arith.mulf %5, %6 : vector<4x128xf32>
    %8 = arith.addf %3, %7 : vector<4x128xf32>
    %c0_5 = arith.constant 0 : index
    %c0_6 = arith.constant 0 : index
    %c0_7 = arith.constant 0 : index
    %9 = vector.load %arg4[%c0_5, %c0_6, %c0_7] : memref<1x4x128xf32, #tpu.memory_space<vmem>>, vector<1x4x128xf32>
    %10 = vector.shape_cast %9 : vector<1x4x128xf32> to vector<4x128xf32>
    %11 = vector.shape_cast %8 : vector<4x128xf32> to vector<1x4x128xf32>
    tpu.vector_store %arg4[%c0_5, %c0_6, %c0_7], %11 {strides = array<i32>} : memref<1x4x128xf32, #tpu.memory_space<vmem>>, vector<1x4x128xf32>,
    %c1_i32 = arith.constant 1 : i32
    %12 = arith.cmpi slt, %arg1, %c1_i32 : i32
    %13 = arith.extui %12 : i1 to i32
    %c0_i32_8 = arith.constant 0 : i32
    %14 = arith.cmpi ne, %13, %c0_i32_8 : i32
    scf.if %14 {
      %c0_11 = arith.constant 0 : index
      %c0_12 = arith.constant 0 : index
      %18 = vector.load %arg6[%c0_11, %c0_12] : memref<4x128xf32, #tpu.memory_space<vmem>>, vector<4x128xf32>
      tpu.vector_store %arg6[%c0_11, %c0_12], %8 {strides = array<i32>} : memref<4x128xf32, #tpu.memory_space<vmem>>, vector<4x128xf32>,
    } else {
    }
    %c1_i32_9 = arith.constant 1 : i32
    %15 = arith.cmpi eq, %arg1, %c1_i32_9 : i32
    %16 = arith.extui %15 : i1 to i32
    %c0_i32_10 = arith.constant 0 : i32
    %17 = arith.cmpi ne, %16, %c0_i32_10 : i32
    scf.if %17 {
      %c0_11 = arith.constant 0 : index
      %c0_12 = arith.constant 0 : index
      %18 = vector.load %arg5[%c0_11, %c0_12] : memref<4x128xf32, #tpu.memory_space<vmem>>, vector<4x128xf32>
      tpu.vector_store %arg5[%c0_11, %c0_12], %8 {strides = array<i32>} : memref<4x128xf32, #tpu.memory_space<vmem>>, vector<4x128xf32>,
    } else {
    }
    return
  }
  func.func @transform_0(%arg0: i32, %arg1: i32) -> (i32, i32) {
    %c0_i32 = arith.constant 0 : i32
    %c0_i32_0 = arith.constant 0 : i32
    return %arg0, %c0_i32 : i32, i32
  }
  func.func @transform_1(%arg0: i32, %arg1: i32) -> (i32, i32, i32) {
    %c0_i32 = arith.constant 0 : i32
    %c0_i32_0 = arith.constant 0 : i32
    return %arg1, %arg0, %c0_i32 : i32, i32, i32
  }
  func.func @transform_2(%arg0: i32, %arg1: i32) -> (i32, i32, i32) {
    %c0_i32 = arith.constant 0 : i32
    %c0_i32_0 = arith.constant 0 : i32
    return %arg1, %arg0, %c0_i32 : i32, i32, i32
  }
  func.func @transform_3(%arg0: i32, %arg1: i32) -> (i32, i32) {
    %c0_i32 = arith.constant 0 : i32
    %c0_i32_0 = arith.constant 0 : i32
    return %arg0, %c0_i32 : i32, i32
  }
}

module attributes {stable_mosaic.version = 11 : i64} {
  func.func @_ln_head_kernel(%arg0: i32, %arg1: i32, %arg2: memref<16x32xf32, #tpu.memory_space<vmem>>, %arg3: memref<1x32xf32, #tpu.memory_space<vmem>>, %arg4: memref<1x32xf32, #tpu.memory_space<vmem>>, %arg5: memref<64x32xf32, #tpu.memory_space<vmem>>, %arg6: memref<16x64xf32, #tpu.memory_space<vmem>>, %arg7: memref<16x32xf32, #tpu.memory_space<vmem>>) attributes {dimension_semantics = [#tpu.dimension_semantics<parallel>, #tpu.dimension_semantics<arbitrary>], iteration_bounds = array<i64: 1, 1>, scalar_prefetch = 0 : i64, scratch_operands = 1 : i64, tpu.core_type = #tpu.core_type<tc>, window_params = [{transform_indices = @transform_0, window_bounds = array<i64: 16, 32>}, {pipeline_mode = #tpu.pipeline_mode<synchronous>, transform_indices = @transform_1, window_bounds = array<i64: 1, 32>}, {pipeline_mode = #tpu.pipeline_mode<synchronous>, transform_indices = @transform_2, window_bounds = array<i64: 1, 32>}, {transform_indices = @transform_3, window_bounds = array<i64: 64, 32>}, {transform_indices = @transform_4, window_bounds = array<i64: 16, 64>}]} {
    %c0_i32 = arith.constant 0 : i32
    %0 = arith.cmpi eq, %arg1, %c0_i32 : i32
    %1 = arith.extui %0 : i1 to i32
    %c0_i32_0 = arith.constant 0 : i32
    %2 = arith.cmpi ne, %1, %c0_i32_0 : i32
    scf.if %2 {
      %c0_6 = arith.constant 0 : index
      %c0_7 = arith.constant 0 : index
      %7 = vector.load %arg2[%c0_6, %c0_7] : memref<16x32xf32, #tpu.memory_space<vmem>>, vector<16x32xf32>
      %cst_8 = arith.constant dense<0.000000e+00> : vector<16xf32>
      %8 = vector.multi_reduction <add>, %7, %cst_8 [1] : vector<16x32xf32> to vector<16xf32>
      %9 = vector.shape_cast %8 : vector<16xf32> to vector<16x1xf32>
      %cst_9 = arith.constant 3.200000e+01 : f32
      %10 = vector.broadcast %cst_9 : f32 to vector<16x1xf32>
      %11 = arith.divf %9, %10 : vector<16x1xf32>
      %12 = vector.broadcast %11 : vector<16x1xf32> to vector<16x32xf32>
      %13 = arith.subf %7, %12 : vector<16x32xf32>
      %14 = arith.mulf %13, %13 : vector<16x32xf32>
      %cst_10 = arith.constant dense<0.000000e+00> : vector<16xf32>
      %15 = vector.multi_reduction <add>, %14, %cst_10 [1] : vector<16x32xf32> to vector<16xf32>
      %16 = vector.shape_cast %15 : vector<16xf32> to vector<16x1xf32>
      %cst_11 = arith.constant 3.200000e+01 : f32
      %17 = vector.broadcast %cst_11 : f32 to vector<16x1xf32>
      %18 = arith.divf %16, %17 : vector<16x1xf32>
      %cst_12 = arith.constant 9.99999974E-6 : f32
      %19 = vector.broadcast %cst_12 : f32 to vector<16x1xf32>
      %20 = arith.addf %18, %19 : vector<16x1xf32>
      %21 = math.rsqrt %20 : vector<16x1xf32>
      %22 = vector.broadcast %21 : vector<16x1xf32> to vector<16x32xf32>
      %23 = arith.mulf %13, %22 : vector<16x32xf32>
      %c0_13 = arith.constant 0 : index
      %c0_14 = arith.constant 0 : index
      %24 = vector.load %arg3[%c0_13, %c0_14] : memref<1x32xf32, #tpu.memory_space<vmem>>, vector<1x32xf32>
      %25 = vector.broadcast %24 : vector<1x32xf32> to vector<16x32xf32>
      %26 = arith.mulf %23, %25 : vector<16x32xf32>
      %c0_15 = arith.constant 0 : index
      %c0_16 = arith.constant 0 : index
      %27 = vector.load %arg4[%c0_15, %c0_16] : memref<1x32xf32, #tpu.memory_space<vmem>>, vector<1x32xf32>
      %28 = vector.broadcast %27 : vector<1x32xf32> to vector<16x32xf32>
      %29 = arith.addf %26, %28 : vector<16x32xf32>
      %c0_17 = arith.constant 0 : index
      %c0_18 = arith.constant 0 : index
      %30 = vector.load %arg7[%c0_17, %c0_18] : memref<16x32xf32, #tpu.memory_space<vmem>>, vector<16x32xf32>
      tpu.vector_store %arg7[%c0_17, %c0_18], %29 {strides = array<i32>} : memref<16x32xf32, #tpu.memory_space<vmem>>, vector<16x32xf32>,
    } else {
    }
    %c0 = arith.constant 0 : index
    %c0_1 = arith.constant 0 : index
    %3 = vector.load %arg7[%c0, %c0_1] : memref<16x32xf32, #tpu.memory_space<vmem>>, vector<16x32xf32>
    %c0_2 = arith.constant 0 : index
    %c0_3 = arith.constant 0 : index
    %4 = vector.load %arg5[%c0_2, %c0_3] : memref<64x32xf32, #tpu.memory_space<vmem>>, vector<64x32xf32>
    %cst = arith.constant dense<0.000000e+00> : vector<16x64xf32>
    %5 = tpu.matmul %3, %4, %cst {dimension_numbers = #tpu.dot_dimension_numbers<[1], [1], [0], [0], [0, 0, 1, 0], [], []>} : vector<16x32xf32>, vector<64x32xf32>, vector<16x64xf32> -> vector<16x64xf32>
    %c0_4 = arith.constant 0 : index
    %c0_5 = arith.constant 0 : index
    %6 = vector.load %arg6[%c0_4, %c0_5] : memref<16x64xf32, #tpu.memory_space<vmem>>, vector<16x64xf32>
    tpu.vector_store %arg6[%c0_4, %c0_5], %5 {strides = array<i32>} : memref<16x64xf32, #tpu.memory_space<vmem>>, vector<16x64xf32>,
    return
  }
  func.func @transform_0(%arg0: i32, %arg1: i32) -> (i32, i32) {
    %c0_i32 = arith.constant 0 : i32
    %c0_i32_0 = arith.constant 0 : i32
    return %arg0, %c0_i32 : i32, i32
  }
  func.func @transform_1(%arg0: i32, %arg1: i32) -> (i32, i32) {
    %c0_i32 = arith.constant 0 : i32
    %c0_i32_0 = arith.constant 0 : i32
    %c0_i32_1 = arith.constant 0 : i32
    return %c0_i32, %c0_i32_0 : i32, i32
  }
  func.func @transform_2(%arg0: i32, %arg1: i32) -> (i32, i32) {
    %c0_i32 = arith.constant 0 : i32
    %c0_i32_0 = arith.constant 0 : i32
    %c0_i32_1 = arith.constant 0 : i32
    return %c0_i32, %c0_i32_0 : i32, i32
  }
  func.func @transform_3(%arg0: i32, %arg1: i32) -> (i32, i32) {
    %c0_i32 = arith.constant 0 : i32
    %c0_i32_0 = arith.constant 0 : i32
    return %arg1, %c0_i32 : i32, i32
  }
  func.func @transform_4(%arg0: i32, %arg1: i32) -> (i32, i32) {
    %c0_i32 = arith.constant 0 : i32
    return %arg0, %arg1 : i32, i32
  }
}

</mosaic_0001>

<llo_original>
// kernel: squeeze.2
$region0: #{squeeze.2}
  %s0 = inlined_call_operand.vmem [shape: f32[1,4,128], index: 0, kind: input, shape index: {}]
  %s1 = inlined_call_operand.hbm [shape: f32[2,8,32], index: 1, kind: output, shape index: {}]
  $region1: #{squeeze.2} parent=0
    #allocation0 [shape = 'u8[8192]{0}', space=vmem, size = 0x2000, scoped, tag = 'operand span for operand 1']
    #allocation1 [shape = 's32[1]{0}', space=sflag, size = 0x4, scoped, tag = 'scoped memory for squeeze.2']
    #allocation2 [shape = 'u8[4096]{0}', space=vmem, size = 0x1000, scoped, tag = 'scoped mem for input reshape']
    %2 = vsyncpa [#allocation1], 0
    %s4 = sshllo.u32 0, 4
    %v5 = vld [vmem:[%s0] sm:%s4]
    %6 = vst [vmem:[#allocation2] sm:%s4] %v5
    %v7 = vld [vmem:[#allocation2] sm:$0xf]
    %vm8 = vcmask 261120
    %9 = vst.msk [vmem:[#allocation0] ss:$4 sm:$0xf] %vm8, %v7
    %v10 = vld [vmem:[#allocation2] sm:$0xf]
    %11 = vrot.lane.b32.xlu0 %v10, 96
    %v12 = vpop.permute.xlu0 %11
    %vm13 = vcmask 261120
    %s14 = scalar_lea.vmem [#allocation0], 1
    %15 = vst.msk [vmem:[%s14] ss:$4 sm:$0xf] %vm13, %v12
    %v16 = vld [vmem:[#allocation2] sm:$0xf]
    %17 = vrot.lane.b32.xlu0 %v16, 64
    %v18 = vpop.permute.xlu0 %17
    %vm19 = vcmask 261120
    %s20 = scalar_lea.vmem [#allocation0], 2
    %21 = vst.msk [vmem:[%s20] ss:$4 sm:$0xf] %vm19, %v18
    %v22 = vld [vmem:[#allocation2] sm:$0xf]
    %23 = vrot.lane.b32.xlu0 %v22, 32
    %v24 = vpop.permute.xlu0 %23
    %vm25 = vcmask 261120
    %s26 = scalar_lea.vmem [#allocation0], 3
    %27 = vst.msk [vmem:[%s26] ss:$4 sm:$0xf] %vm25, %v24
    %s29 = ssub.s32 256, 256
    %30 = vsyncadd [#allocation1], %s29
    %s32 = sshll.u32 [#allocation0], 4
    %s33 = int_to_ptr.vmem [resolvable:$true] %s32
    %35 = dma.vmem_to_hbm [thread:$0]  %s33, 256, %s1, [#allocation1]
    %36 = dma.done [#allocation1], 256
    %37 = vsyncpa [#allocation1], 1

// kernel: rwkv_model_forward.3
$region0: #{rwkv_model_forward.3}
  #allocation0 [shape = 'u32[]', space=smem, size = 0x4, offset = 0x4, fixed_abs, tag = 'smem constant byte address 0x4 - core index']
  #allocation1 [shape = 'u32[144,128]{1,0:T(1,128)}', space=vmem, size = 0x12000, scoped, tag = 'internal scratch']
  #allocation2 [shape = 'f32[16,32]{1,0:T(8,128)}', space=vmem, size = 0x2000, scoped, tag = 'scratch operand']
  %s0 = inlined_call_operand.vmem [shape: f32[16,32], index: 0, kind: input, shape index: {}]
  %s1 = inlined_call_operand.vmem [shape: f32[1,32], index: 1, kind: input, shape index: {}]
  %s2 = inlined_call_operand.vmem [shape: f32[1,32], index: 2, kind: input, shape index: {}]
  %s3 = inlined_call_operand.vmem [shape: f32[64,32], index: 3, kind: input, shape index: {}]
  %s4 = inlined_call_operand.hbm [shape: f32[16,64], index: 4, kind: output, shape index: {}]
  %s5 = sld [smem:[#allocation0]]
  $region30: #{rwkv_model_forward.3} parent=0
    _
  %s7 = ssub.s32 1, %s5
  %s8 = scalar_select 0, %s7, %s5
  $region1: #{rwkv_model_forward.3} parent=0
    #allocation3 [shape = 'u8[8192]{0}', space=vmem, size = 0x2000, scoped, tag = 'output window, operand 0, single buffered']
    #allocation4 [shape = 's32[1]{0}', space=sflag, size = 0x4, scoped, tag = 'scoped memory for rwkv_model_forward.3']
    %9 = vsyncpa [#allocation4], 0
    // Predicated region
    $region2: #{rwkv_model_forward.3} parent=1 // pred_check
      _
    $region3: #{rwkv_model_forward.3} parent=1 // pred_check_branch
      %11 = sbr.rel (0) target = $region5
    $region4: #{rwkv_model_forward.3} parent=1 // pred_region
      _
    $region5: #{rwkv_model_forward.3} parent=1 // pred_fallthru
      _
    // Predicated region
    $region6: #{rwkv_model_forward.3} parent=1 // pred_check
      _
    $region7: #{rwkv_model_forward.3} parent=1 // pred_check_branch
      %13 = sbr.rel (0) target = $region9
    $region8: #{rwkv_model_forward.3} parent=1 // pred_region
      _
    $region9: #{rwkv_model_forward.3} parent=1 // pred_fallthru
      _
    // Predicated region
    $region10: #{rwkv_model_forward.3} parent=1 // pred_check
      _
    $region11: #{rwkv_model_forward.3} parent=1 // pred_check_branch
      %15 = sbr.rel (0) target = $region13
    $region12: #{rwkv_model_forward.3} parent=1 // pred_region
      _
    $region13: #{rwkv_model_forward.3} parent=1 // pred_fallthru
      _
    // Predicated region
    $region14: #{rwkv_model_forward.3} parent=1 // pred_check
      _
    $region15: #{rwkv_model_forward.3} parent=1 // pred_check_branch
      %17 = sbr.rel (0) target = $region17
    $region16: #{rwkv_model_forward.3} parent=1 // pred_region
      _
    $region17: #{rwkv_model_forward.3} parent=1 // pred_fallthru
      _
    %p18 = scmp.eq.s32.totalorder 0, 0
    // Predicated region
    $region18: #{rwkv_model_forward.3} parent=1 // pred_check
      %p19 = pneg %p18
    $region19: #{rwkv_model_forward.3} parent=1 // pred_check_branch
      %21 = sbr.rel (%p19) target = $region21
    $region20: #{rwkv_model_forward.3} parent=1 // pred_region
      %v22 = vld [vmem:[%s0] sm:$0xff]
      %v23 = vld [vmem:[%s0 + $0x8] sm:$0xff]
      %vm24 = vcmask 261120
      %v25 = vsel %vm24, %v22, 0.0
      %26 = vadd.xlane.f32.xlu0 %v25
      %v27 = vpop.xlane.xlu0 %26
      %v28 = vsel %vm24, %v23, 0.0
      %29 = vadd.xlane.f32.xlu0 %v28
      %v30 = vpop.xlane.xlu0 %29
      %v31 = vrcp.pop 32.0
      %v32 = vmul.f32 %v27, %v31
      %v33 = vmul.f32 %v30, %v31
      %v34 = vsub.f32 %v22, %v32
      %v35 = vsub.f32 %v23, %v33
      %v36 = vmul.f32 %v34, %v34
      %v37 = vmul.f32 %v35, %v35
      %v38 = vsel %vm24, %v36, 0.0
      %39 = vadd.xlane.f32.xlu0 %v38
      %v40 = vpop.xlane.xlu0 %39
      %v41 = vsel %vm24, %v37, 0.0
      %42 = vadd.xlane.f32.xlu0 %v41
      %v43 = vpop.xlane.xlu0 %42
      %v44 = vmul.f32 %v40, %v31
      %v45 = vmul.f32 %v43, %v31
      %v46 = vadd.f32 %v44, 1e-05
      %v47 = vadd.f32 %v45, 1e-05
      %v48 = vrsqrt.pop %v46
      %v49 = vrsqrt.pop %v47
      %v50 = vmul.f32 %v34, %v48
      %v51 = vmul.f32 %v35, %v49
      %v52 = vld [vmem:[%s1] sm:$0x1]
      %v54 = vlaneseq
      %v55 = vshrl.u32 %v54, 7
      %v56 = vsub.s32 0, %v55
      %v57 = vrot.slane %v52, %v56
      %v59 = vmul.f32 %v50, %v57
      %v60 = vmul.f32 %v51, %v57
      %v61 = vld [vmem:[%s2] sm:$0x1]
      %v63 = vlaneseq
      %v64 = vshrl.u32 %v63, 7
      %v65 = vsub.s32 0, %v64
      %v66 = vrot.slane %v61, %v65
      %v68 = vadd.f32 %v59, %v66
      %v69 = vadd.f32 %v60, %v66
      %70 = vst.msk [vmem:[#allocation2] sm:$0xff] %vm24, %v68
      %71 = vst.msk [vmem:[#allocation2 + $0x8] sm:$0xff] %vm24, %v69
    $region21: #{rwkv_model_forward.3} parent=1 // pred_fallthru
      _
    %v72 = vld [vmem:[#allocation2] sm:$0xff]
    %v73 = vld [vmem:[#allocation2 + $0x8] sm:$0xff]
    %v74 = vld [vmem:[%s3] sm:$0xff]
    %v75 = vld [vmem:[%s3 + $0x8] sm:$0xff]
    %v76 = vld [vmem:[%s3 + $0x10] sm:$0xff]
    %v77 = vld [vmem:[%s3 + $0x18] sm:$0xff]
    %v78 = vld [vmem:[%s3 + $0x20] sm:$0xff]
    %v79 = vld [vmem:[%s3 + $0x28] sm:$0xff]
    %v80 = vld [vmem:[%s3 + $0x30] sm:$0xff]
    %v81 = vld [vmem:[%s3 + $0x38] sm:$0xff]
    %vm82 = vcmask 261120
    %v84 = vsel %vm82, %v72, 0
    %v87 = vsel %vm82, %v73, 0
    %v90 = vsel %vm82, %v74, 0
    %v93 = vsel %vm82, %v75, 0
    %v96 = vsel %vm82, %v76, 0
    %v99 = vsel %vm82, %v77, 0
    %v102 = vsel %vm82, %v78, 0
    %v105 = vsel %vm82, %v79, 0
    %v108 = vsel %vm82, %v80, 0
    %v111 = vsel %vm82, %v81, 0
    %113 = vmatprep.subr.mxu0 0.0
    %114 = vmatpush1.xpose.msra.mxu0 %v90
    %115 = vmatprep.subr.mxu0 0.0
    %116 = vmatpush1.xpose.msra.mxu0 %v93
    %117 = vmatprep.subr.mxu0 0.0
    %118 = vmatpush1.xpose.msra.mxu0 %v96
    %119 = vmatprep.subr.mxu0 0.0
    %120 = vmatpush1.xpose.msra.mxu0 %v99
    %121 = vmatprep.subr.mxu0 0.0
    %122 = vmatpush1.xpose.msra.mxu0 %v102
    %123 = vmatprep.subr.mxu0 0.0
    %124 = vmatpush1.xpose.msra.mxu0 %v105
    %125 = vmatprep.subr.mxu0 0.0
    %126 = vmatpush1.xpose.msra.mxu0 %v108
    %127 = vmatprep.subr.mxu0 0.0
    %128 = vmatpush1.xpose.msra.mxu0 %v111
    %129 = vmatprep.subr.mxu0 0.0
    %130 = vmatpush1.xpose.msra.mxu0 0.0
    %131 = vmatprep.subr.mxu0 0.0
    %132 = vmatpush1.xpose.msra.mxu0 0.0
    %133 = vmatprep.subr.mxu0 0.0
    %134 = vmatpush1.xpose.msra.mxu0 0.0
    %135 = vmatprep.subr.mxu0 0.0
    %136 = vmatpush1.xpose.msra.mxu0 0.0
    %137 = vmatprep.subr.mxu0 0.0
    %138 = vmatpush1.xpose.msra.mxu0 0.0
    %139 = vmatprep.subr.mxu0 0.0
    %140 = vmatpush1.xpose.msra.mxu0 0.0
    %141 = vmatprep.subr.mxu0 0.0
    %142 = vmatpush1.xpose.msra.mxu0 0.0
    %143 = vmatprep.subr.mxu0 0.0
    %144 = vmatpush1.xpose.msra.mxu0 0.0
    %145 = vmatprep.subr.mxu0 0.0
    %146 = vmatpush1.xpose.msra.mxu0 0.0
    %147 = vmatprep.subr.mxu0 0.0
    %148 = vmatpush1.xpose.msra.mxu0 0.0
    %149 = vmatprep.subr.mxu0 0.0
    %150 = vmatpush1.xpose.msra.mxu0 0.0
    %151 = vmatprep.subr.mxu0 0.0
    %152 = vmatpush1.xpose.msra.mxu0 0.0
    %153 = vmatprep.subr.mxu0 0.0
    %154 = vmatpush1.xpose.msra.mxu0 0.0
    %155 = vmatprep.subr.mxu0 0.0
    %156 = vmatpush1.xpose.msra.mxu0 0.0
    %157 = vmatprep.subr.mxu0 0.0
    %158 = vmatpush1.xpose.msra.mxu0 0.0
    %159 = vmatprep.subr.mxu0 0.0
    %160 = vmatpush1.xpose.msra.mxu0 0.0
    %161 = vmatprep.subr.mxu0 0.0
    %162 = vmatpush1.xpose.msra.mxu0 0.0
    %163 = vmatprep.subr.mxu0 0.0
    %164 = vmatpush1.xpose.msra.mxu0 0.0
    %165 = vmatprep.subr.mxu0 0.0
    %166 = vmatpush1.xpose.msra.mxu0 0.0
    %167 = vmatprep.subr.mxu0 0.0
    %168 = vmatpush1.xpose.msra.mxu0 0.0
    %169 = vmatprep.subr.mxu0 0.0
    %170 = vmatpush1.xpose.msra.mxu0 0.0
    %171 = vmatprep.subr.mxu0 0.0
    %172 = vmatpush1.xpose.msra.mxu0 0.0
    %173 = vmatprep.subr.mxu0 0.0
    %174 = vmatpush1.xpose.msra.mxu0 0.0
    %175 = vmatprep.subr.mxu0 0.0
    %176 = vmatpush1.xpose.msra.mxu0 0.0
    %177 = vmatprep.mubr.f32.mxu0 0.0
    %178 = vmatmul.mubr.f32.gmra.mrb[0].mxu0 %v84
    %v179 = vpop.f32.mrb[0].mxu0
    %v180 = vadd.f32 0.0, %v179
    %v181 = vpop.f32.mrb[0].mxu0
    %182 = vmatprep.mubr.f32.mxu0 0.0
    %183 = vmatmul.mubr.f32.gmra.mrb[0].mxu0 %v87
    %v184 = vpop.f32.mrb[0].mxu0
    %v185 = vadd.f32 0.0, %v184
    %v186 = vpop.f32.mrb[0].mxu0
    %187 = vdwg.mxu0
    %vm188 = vcmask 523264
    %189 = vst.msk [vmem:[#allocation3] sm:$0xff] %vm188, %v180
    %190 = vst.msk [vmem:[#allocation3 + $0x8] sm:$0xff] %vm188, %v185
    // Predicated region
    $region22: #{rwkv_model_forward.3} parent=1 // pred_check
      _
    $region23: #{rwkv_model_forward.3} parent=1 // pred_check_branch
      %192 = sbr.rel (0) target = $region25
    $region24: #{rwkv_model_forward.3} parent=1 // pred_region
      %s194 = ssub.s32 256, 256
      %195 = vsyncadd [#allocation4], %s194
      %s196 = sshll.u32 [#allocation3], 4
      %s197 = int_to_ptr.vmem [resolvable:$true] %s196
      %202 = dma.vmem_to_hbm [thread:$0]  %s197, 256, %s4, [#allocation4], 128, 128, 8
    $region25: #{rwkv_model_forward.3} parent=1 // pred_fallthru
      _
    // Predicated region
    $region26: #{rwkv_model_forward.3} parent=1 // pred_check
      _
    $region27: #{rwkv_model_forward.3} parent=1 // pred_check_branch
      %204 = sbr.rel (0) target = $region29
    $region28: #{rwkv_model_forward.3} parent=1 // pred_region
      %205 = dma.done [#allocation4], 256
    $region29: #{rwkv_model_forward.3} parent=1 // pred_fallthru
      _
    %206 = vsyncpa [#allocation4], 1

// kernel: rwkv_model_forward.2
$region0: #{rwkv_model_forward.2}
  #allocation0 [shape = 'u32[]', space=smem, size = 0x4, offset = 0x4, fixed_abs, tag = 'smem constant byte address 0x4 - core index']
  #allocation1 [shape = 'u32[144,128]{1,0:T(1,128)}', space=vmem, size = 0x12000, scoped, tag = 'internal scratch']
  #allocation2 [shape = 'f32[4,128]{1,0:T(4,128)}', space=vmem, size = 0x800, scoped, tag = 'scratch operand']
  %s0 = inlined_call_operand.vmem [shape: f32[4,128], index: 0, kind: input, shape index: {}]
  %s1 = inlined_call_operand.vmem [shape: f32[2,4,128], index: 1, kind: input, shape index: {}]
  %s2 = inlined_call_operand.vmem [shape: f32[2,4,128], index: 2, kind: output, shape index: {0}]
  %s3 = inlined_call_operand.vmem [shape: f32[4,128], index: 3, kind: output, shape index: {1}]
  %4 = xla_tuple %s2, %s3
  %s5 = sld [smem:[#allocation0]]
  $region61: #{rwkv_model_forward.2} parent=0
    _
  %s7 = ssub.s32 1, %s5
  %s8 = scalar_select 0, %s7, %s5
  loop: start=0, step=1, limit=4
  $region2: #{rwkv_model_forward.2} parent=0 // loop_pre_header
    _
  $region3: #{rwkv_model_forward.2} parent=0 // loop_header
    %s10 = sphi 0, %s14
    %p11 = scmp.ge.s32.totalorder %s10, 4
    %s17 = sphi 0, %s29
    %s18 = sphi 0, %s25
    %s19 = sphi 0, %s17
    %s20 = sphi 0, %s18
    %s21 = sphi 0, %s19
    %s22 = sphi 0, %s20
    %s32 = sphi 0, %s34
    %s35 = sphi 0, %s32
    %s36 = sphi 0, %s35
    %s52 = sphi 0, %s36
    %s60 = sphi 0, %s62
    %s63 = sphi 0, %s60
    %s64 = sphi 0, %s63
    %s80 = sphi 0, %s64
    %s88 = sphi 0, %s90
    %s91 = sphi 0, %s88
    %s92 = sphi 0, %s91
    %s108 = sphi 0, %s92
    %s114 = sphi 0, %s116
    %s117 = sphi 0, %s114
    %s118 = sphi 0, %s117
    %s134 = sphi 0, %s118
  $region4: #{rwkv_model_forward.2} parent=0 // loop_header_branch
    %13 = sbr.rel (%p11) target = $region8
  $region5: #{rwkv_model_forward.2} parent=0 // loop_body
    %s15 = ssub.s32 %s10, 1
    %s16 = ssub.s32 %s10, 2
    %s23 = sadd.s32 1, %s18
    %p24 = scmp.ge.s32.totalorder %s23, 2
    %s25 = scalar_select %p24, 0, %s23
    %s26 = sadd.s32 1, %s17
    %s27 = scalar_select %p24, %s26, %s17
    %p28 = scmp.ge.s32.totalorder %s27, 1
    %s29 = scalar_select %p28, 0, %s27
    %s30 = ssub.s32 %s17, %s29
    %p31 = scmp.eq.s32.totalorder %s30, 0
    %s33 = sadd.s32 %s32, 1
    %s34 = scalar_select %p31, %s32, %s33
    %p37 = pneg %p31
    %p38 = scmp.eq.s32.totalorder %s10, 1
    %p39 = por %p37, %p38
    %p40 = scmp.ne.s32.totalorder %s32, %s35
    %p41 = scmp.eq.s32.totalorder %s10, 0
    %p42 = por %p40, %p41
    %p43 = scmp.ne.s32.totalorder %s32, %s35
    %p44 = scmp.eq.s32.totalorder %s15, 1
    %p45 = por %p43, %p44
    %p46 = scmp.ne.s32.totalorder %s35, %s36
    %p47 = scmp.eq.s32.totalorder %s15, 0
    %p48 = por %p46, %p47
    %p49 = scmp.ne.s32.totalorder %s35, %s36
    %p50 = scmp.eq.s32.totalorder %s16, 1
    %p51 = por %p49, %p50
    %p53 = scmp.ne.s32.totalorder %s36, %s52
    %p54 = scmp.eq.s32.totalorder %s16, 0
    %p55 = por %p53, %p54
    %s56 = ssub.s32 %s18, %s25
    %s57 = ssub.s32 %s17, %s29
    %s58 = sor.u32 %s56, %s57
    %p59 = scmp.eq.s32.totalorder %s58, 0
    %s61 = sadd.s32 %s60, 1
    %s62 = scalar_select %p59, %s60, %s61
    %p65 = pneg %p59
    %p66 = scmp.eq.s32.totalorder %s10, 1
    %p67 = por %p65, %p66
    %p68 = scmp.ne.s32.totalorder %s60, %s63
    %p69 = scmp.eq.s32.totalorder %s10, 0
    %p70 = por %p68, %p69
    %p71 = scmp.ne.s32.totalorder %s60, %s63
    %p72 = scmp.eq.s32.totalorder %s15, 1
    %p73 = por %p71, %p72
    %p74 = scmp.ne.s32.totalorder %s63, %s64
    %p75 = scmp.eq.s32.totalorder %s15, 0
    %p76 = por %p74, %p75
    %p77 = scmp.ne.s32.totalorder %s63, %s64
    %p78 = scmp.eq.s32.totalorder %s16, 1
    %p79 = por %p77, %p78
    %p81 = scmp.ne.s32.totalorder %s64, %s80
    %p82 = scmp.eq.s32.totalorder %s16, 0
    %p83 = por %p81, %p82
    %s84 = ssub.s32 %s18, %s25
    %s85 = ssub.s32 %s17, %s29
    %s86 = sor.u32 %s84, %s85
    %p87 = scmp.eq.s32.totalorder %s86, 0
    %s89 = sadd.s32 %s88, 1
    %s90 = scalar_select %p87, %s88, %s89
    %p93 = pneg %p87
    %p94 = scmp.eq.s32.totalorder %s10, 1
    %p95 = por %p93, %p94
    %p96 = scmp.ne.s32.totalorder %s88, %s91
    %p97 = scmp.eq.s32.totalorder %s10, 0
    %p98 = por %p96, %p97
    %p99 = scmp.ne.s32.totalorder %s88, %s91
    %p100 = scmp.eq.s32.totalorder %s15, 1
    %p101 = por %p99, %p100
    %p102 = scmp.ne.s32.totalorder %s91, %s92
    %p103 = scmp.eq.s32.totalorder %s15, 0
    %p104 = por %p102, %p103
    %p105 = scmp.ne.s32.totalorder %s91, %s92
    %p106 = scmp.eq.s32.totalorder %s16, 1
    %p107 = por %p105, %p106
    %p109 = scmp.ne.s32.totalorder %s92, %s108
    %p110 = scmp.eq.s32.totalorder %s16, 0
    %p111 = por %p109, %p110
    %s112 = ssub.s32 %s17, %s29
    %p113 = scmp.eq.s32.totalorder %s112, 0
    %s115 = sadd.s32 %s114, 1
    %s116 = scalar_select %p113, %s114, %s115
    %p119 = pneg %p113
    %p120 = scmp.eq.s32.totalorder %s10, 1
    %p121 = por %p119, %p120
    %p122 = scmp.ne.s32.totalorder %s114, %s117
    %p123 = scmp.eq.s32.totalorder %s10, 0
    %p124 = por %p122, %p123
    %p125 = scmp.ne.s32.totalorder %s114, %s117
    %p126 = scmp.eq.s32.totalorder %s15, 1
    %p127 = por %p125, %p126
    %p128 = scmp.ne.s32.totalorder %s117, %s118
    %p129 = scmp.eq.s32.totalorder %s15, 0
    %p130 = por %p128, %p129
    %p131 = scmp.ne.s32.totalorder %s117, %s118
    %p132 = scmp.eq.s32.totalorder %s16, 1
    %p133 = por %p131, %p132
    %p135 = scmp.ne.s32.totalorder %s118, %s134
    %p136 = scmp.eq.s32.totalorder %s16, 0
    %p137 = por %p135, %p136
    %p138 = scmp.le.s32.totalorder 1, %s10
    %p139 = scmp.lt.s32.totalorder %s10, 3
    %p140 = pnand %p138, %p139
    %p141 = pneg %p140
    // Predicated region
    $region9: #{rwkv_model_forward.2} parent=5 // pred_check
      _
    $region10: #{rwkv_model_forward.2} parent=5 // pred_check_branch
      %143 = sbr.rel (%p140) target = $region12
    $region11: #{rwkv_model_forward.2} parent=5 // pred_region
      %s144 = ssub.s32 %s10, 1
      // Predicated region
      $region13: #{rwkv_model_forward.2} parent=11 // pred_check
        %p145 = pneg %p48
      $region14: #{rwkv_model_forward.2} parent=11 // pred_check_branch
        %147 = sbr.rel (%p145) target = $region16
      $region15: #{rwkv_model_forward.2} parent=11 // pred_region
        %p148 = scmp.lt.s32.totalorder %s19, 0
        %s149 = scalar_select %p148, %s19, 0
        %s150 = smul.addr %s149, 4
        %s151 = scalar_lea.vmem %s0, %s150
      $region16: #{rwkv_model_forward.2} parent=11 // pred_fallthru
        _
    $region12: #{rwkv_model_forward.2} parent=5 // pred_fallthru
      _
    %p152 = scmp.lt.s32.totalorder %s10, 2
    // Predicated region
    $region17: #{rwkv_model_forward.2} parent=5 // pred_check
      %p153 = pneg %p152
    $region18: #{rwkv_model_forward.2} parent=5 // pred_check_branch
      %155 = sbr.rel (%p153) target = $region20
    $region19: #{rwkv_model_forward.2} parent=5 // pred_region
      // Predicated region
      $region21: #{rwkv_model_forward.2} parent=19 // pred_check
        %p156 = pneg %p70
      $region22: #{rwkv_model_forward.2} parent=19 // pred_check_branch
        %158 = sbr.rel (%p156) target = $region24
      $region23: #{rwkv_model_forward.2} parent=19 // pred_region
        %p159 = scmp.lt.s32.totalorder %s18, 1
        %s160 = scalar_select %p159, %s18, 1
        %p161 = scmp.lt.s32.totalorder %s17, 0
        %s162 = scalar_select %p161, %s17, 0
        %s163 = sadd.s32 %s162, %s160
        %s164 = smul.addr %s163, 4
        %s165 = scalar_lea.vmem %s1, %s164
      $region24: #{rwkv_model_forward.2} parent=19 // pred_fallthru
        _
    $region20: #{rwkv_model_forward.2} parent=5 // pred_fallthru
      _
    %p166 = scmp.le.s32.totalorder 1, %s10
    %p167 = scmp.lt.s32.totalorder %s10, 3
    %p168 = pnand %p166, %p167
    %p169 = pneg %p168
    // Predicated region
    $region25: #{rwkv_model_forward.2} parent=5 // pred_check
      _
    $region26: #{rwkv_model_forward.2} parent=5 // pred_check_branch
      %171 = sbr.rel (%p168) target = $region28
    $region27: #{rwkv_model_forward.2} parent=5 // pred_region
      %s172 = ssub.s32 %s10, 1
      %p173 = scmp.lt.s32.totalorder %s19, 0
      %s174 = scalar_select %p173, %s19, 0
      %s175 = smul.addr %s174, 4
      %s176 = scalar_lea.vmem %s0, %s175
      %p177 = pneg %p48
      %p178 = pneg %p45
      %p179 = scmp.lt.s32.totalorder %s20, 1
      %s180 = scalar_select %p179, %s20, 1
      %p181 = scmp.lt.s32.totalorder %s19, 0
      %s182 = scalar_select %p181, %s19, 0
      %s183 = sadd.s32 %s182, %s180
      %s184 = smul.addr %s183, 4
      %s185 = scalar_lea.vmem %s1, %s184
      %p186 = pneg %p76
      %p187 = pneg %p73
      %p188 = pneg %p104
      %p189 = pneg %p101
      %p190 = scmp.lt.s32.totalorder %s20, 1
      %s191 = scalar_select %p190, %s20, 1
      %p192 = scmp.lt.s32.totalorder %s19, 0
      %s193 = scalar_select %p192, %s19, 0
      %s194 = sadd.s32 %s193, %s191
      %s195 = smul.addr %s194, 4
      %s196 = scalar_lea.vmem %s2, %s195
      %p197 = pneg %p130
      %p198 = pneg %p127
      %p199 = scmp.lt.s32.totalorder %s19, 0
      %s200 = scalar_select %p199, %s19, 0
      %s201 = smul.addr %s200, 4
      %s202 = scalar_lea.vmem %s3, %s201
      %p203 = scmp.lt.s32.totalorder %s19, 0
      %s204 = scalar_select %p203, %s19, 0
      %s205 = smul.addr %s204, 4
      %s206 = scalar_lea.vmem %s0, %s205
      %p207 = scmp.lt.s32.totalorder %s20, 1
      %s208 = scalar_select %p207, %s20, 1
      %p209 = scmp.lt.s32.totalorder %s19, 0
      %s210 = scalar_select %p209, %s19, 0
      %s211 = sadd.s32 %s210, %s208
      %s212 = smul.addr %s211, 4
      %s213 = scalar_lea.vmem %s1, %s212
      %p214 = scmp.lt.s32.totalorder %s20, 1
      %s215 = scalar_select %p214, %s20, 1
      %p216 = scmp.lt.s32.totalorder %s19, 0
      %s217 = scalar_select %p216, %s19, 0
      %s218 = sadd.s32 %s217, %s215
      %s219 = smul.addr %s218, 4
      %s220 = scalar_lea.vmem %s2, %s219
      %p221 = scmp.lt.s32.totalorder %s19, 0
      %s222 = scalar_select %p221, %s19, 0
      %s223 = smul.addr %s222, 4
      %s224 = scalar_lea.vmem %s3, %s223
      %p225 = scmp.eq.s32.totalorder %s20, 0
      // Predicated region
      $region29: #{rwkv_model_forward.2} parent=27 // pred_check
        %p226 = pneg %p225
      $region30: #{rwkv_model_forward.2} parent=27 // pred_check_branch
        %228 = sbr.rel (%p226) target = $region32
      $region31: #{rwkv_model_forward.2} parent=27 // pred_region
        %v229 = vld [vmem:[%s206] sm:$0xf]
        %230 = vst [vmem:[#allocation2] sm:$0xf] %v229
      $region32: #{rwkv_model_forward.2} parent=27 // pred_fallthru
        _
      %v231 = vld [vmem:[#allocation2] sm:$0xf]
      %v232 = vld [vmem:[%s213] sm:$0xf]
      %v233 = vmul.f32 %v232, 0.01
      %v234 = vadd.f32 %v231, %v233
      %235 = vst [vmem:[%s220] sm:$0xf] %v234
      %p236 = scmp.lt.s32.totalorder %s20, 1
      // Predicated region
      $region33: #{rwkv_model_forward.2} parent=27 // pred_check
        %p237 = pneg %p236
      $region34: #{rwkv_model_forward.2} parent=27 // pred_check_branch
        %239 = sbr.rel (%p237) target = $region36
      $region35: #{rwkv_model_forward.2} parent=27 // pred_region
        %240 = vst [vmem:[#allocation2] sm:$0xf] %v234
      $region36: #{rwkv_model_forward.2} parent=27 // pred_fallthru
        _
      %p241 = scmp.eq.s32.totalorder %s20, 1
      // Predicated region
      $region37: #{rwkv_model_forward.2} parent=27 // pred_check
        %p242 = pneg %p241
      $region38: #{rwkv_model_forward.2} parent=27 // pred_check_branch
        %244 = sbr.rel (%p242) target = $region40
      $region39: #{rwkv_model_forward.2} parent=27 // pred_region
        %245 = vst [vmem:[%s224] sm:$0xf] %v234
      $region40: #{rwkv_model_forward.2} parent=27 // pred_fallthru
        _
      %p246 = scmp.lt.s32.totalorder %s20, 1
      %s247 = scalar_select %p246, %s20, 1
      %p248 = scmp.lt.s32.totalorder %s19, 0
      %s249 = scalar_select %p248, %s19, 0
      %s250 = sadd.s32 %s249, %s247
      %s251 = smul.addr %s250, 4
      %s252 = scalar_lea.vmem %s2, %s251
      %p253 = scmp.lt.s32.totalorder %s19, 0
      %s254 = scalar_select %p253, %s19, 0
      %s255 = smul.addr %s254, 4
      %s256 = scalar_lea.vmem %s3, %s255
      // Predicated region
      $region41: #{rwkv_model_forward.2} parent=27 // pred_check
        %p257 = pneg %p101
      $region42: #{rwkv_model_forward.2} parent=27 // pred_check_branch
        %259 = sbr.rel (%p257) target = $region44
      $region43: #{rwkv_model_forward.2} parent=27 // pred_region
        _
      $region44: #{rwkv_model_forward.2} parent=27 // pred_fallthru
        _
      // Predicated region
      $region45: #{rwkv_model_forward.2} parent=27 // pred_check
        %p260 = pneg %p127
      $region46: #{rwkv_model_forward.2} parent=27 // pred_check_branch
        %262 = sbr.rel (%p260) target = $region48
      $region47: #{rwkv_model_forward.2} parent=27 // pred_region
        _
      $region48: #{rwkv_model_forward.2} parent=27 // pred_fallthru
        _
      // Predicated region
      $region49: #{rwkv_model_forward.2} parent=27 // pred_check
        %p263 = pneg %p127
      $region50: #{rwkv_model_forward.2} parent=27 // pred_check_branch
        %265 = sbr.rel (%p263) target = $region52
      $region51: #{rwkv_model_forward.2} parent=27 // pred_region
        %p266 = scmp.lt.s32.totalorder %s19, 0
        %s267 = scalar_select %p266, %s19, 0
        %s268 = smul.addr %s267, 4
        %s269 = scalar_lea.vmem %s3, %s268
      $region52: #{rwkv_model_forward.2} parent=27 // pred_fallthru
        _
    $region28: #{rwkv_model_forward.2} parent=5 // pred_fallthru
      _
    %p270 = scmp.le.s32.totalorder 2, %s10
    // Predicated region
    $region53: #{rwkv_model_forward.2} parent=5 // pred_check
      %p271 = pneg %p270
    $region54: #{rwkv_model_forward.2} parent=5 // pred_check_branch
      %273 = sbr.rel (%p271) target = $region56
    $region55: #{rwkv_model_forward.2} parent=5 // pred_region
      %s274 = ssub.s32 %s10, 2
      // Predicated region
      $region57: #{rwkv_model_forward.2} parent=55 // pred_check
        %p275 = pneg %p107
      $region58: #{rwkv_model_forward.2} parent=55 // pred_check_branch
        %277 = sbr.rel (%p275) target = $region60
      $region59: #{rwkv_model_forward.2} parent=55 // pred_region
        %p278 = scmp.lt.s32.totalorder %s22, 1
        %s279 = scalar_select %p278, %s22, 1
        %p280 = scmp.lt.s32.totalorder %s21, 0
        %s281 = scalar_select %p280, %s21, 0
        %s282 = sadd.s32 %s281, %s279
        %s283 = smul.addr %s282, 4
        %s284 = scalar_lea.vmem %s2, %s283
      $region60: #{rwkv_model_forward.2} parent=55 // pred_fallthru
        _
    $region56: #{rwkv_model_forward.2} parent=5 // pred_fallthru
      _
  $region6: #{rwkv_model_forward.2} parent=0 // loop_footer
    %s14 = sadd.s32 1, %s10
  $region7: #{rwkv_model_forward.2} parent=0 // loop_footer_branch
    %9 = sbr.rel target = $region3
  $region8: #{rwkv_model_forward.2} parent=0 // loop_exit
    _

</llo_original>
